<compile_context>
chip_gen: v6e
topology: v6e:2x2x1
jax: 0.10.0
libtpu: 0.0.40
codegen_flags: <defaults>
</compile_context>

<pallas_src>
import functools

import jax
import jax.numpy as jnp
from jax.experimental import pallas as pl
from jax.experimental.pallas import tpu as pltpu


def _cdiv(a, b):
    return (a + b - 1) // b


def _round_up(x, m):
    return _cdiv(x, m) * m


def _choose_tile_b(batch, cap=4096, min_tile=16):
    """Adaptive batch tile.

    Big tiles amortize the fixed per-grid-step cost; for batches above `cap`
    pick an even number (>= 2) of grid steps so the "parallel" batch axis can
    shard across the two TensorCores on v7x.  cap=4096 keeps the
    double-buffered x + out tiles at ~2.5 MiB, well under the scoped-VMEM
    defaults on v5e (16 MiB), v6e (32 MiB) and v7x (32 of 64 MiB).
    """
    if batch <= cap:
        return max(_round_up(batch, min_tile), min_tile)
    n_steps = 2 * _cdiv(batch, 2 * cap)          # even, >= 2
    return _round_up(_cdiv(batch, n_steps), min_tile)


def _policy_kernel(x_ref, w1_ref, b1_ref, w2_ref, b2_ref, w3_ref, b3_ref, o_ref):
    """One batch tile: 3 x (bf16 MXU matmul + f32 bias), ReLU, softmax."""
    f32 = jnp.float32
    bf16 = jnp.bfloat16

    def linear(h_bf16, w_ref, b_ref):
        out = jnp.dot(h_bf16, w_ref[...], preferred_element_type=f32)
        return out + b_ref[...]                      # f32 bias add (broadcast)

    h = jnp.maximum(linear(x_ref[...], w1_ref, b1_ref), 0.0).astype(bf16)
    h = jnp.maximum(linear(h, w2_ref, b2_ref), 0.0).astype(bf16)
    # Padded action lanes carry a -1e30 bias (baked in at pack time), so they
    # vanish from the softmax without any per-step iota/where masking.
    logits = linear(h, w3_ref, b3_ref)               # (tile_b, 128) f32

    # Numerically stable softmax over dim=1 (action axis).
    m = jnp.max(logits, axis=1, keepdims=True)
    e = jnp.exp(logits - m)                          # padded lanes underflow to 0
    denom = jnp.sum(e, axis=1, keepdims=True)
    probs = e * pl.reciprocal(denom)                 # exact: rows sum to ~1
    o_ref[...] = probs.astype(o_ref.dtype)           # lane-dense bf16 store


@functools.partial(jax.jit, static_argnames=("a_size", "tile_b"))
def policy_forward(x, w1, b1, w2, b2, w3, b3, *, a_size, tile_b=None):
    """Policy forward pass; returns softmax probabilities [batch, a_size] (f32)."""
    batch, s = x.shape
    s_pad = w1.shape[0]                              # padded input feature dim
    a_pad = w3.shape[1]                              # lane-dense padded action dim
    if tile_b is None:
        tile_b = _choose_tile_b(batch)
    pb = _round_up(batch, tile_b)

    xk = x.astype(jnp.bfloat16)                      # MXU operand dtype
    if pb != batch or s_pad != s:
        xk = jnp.pad(xk, ((0, pb - batch), (0, s_pad - s)))

    def const(shape):                                # VMEM-resident across steps
        return pl.BlockSpec(shape, lambda i: (0, 0))

    out = pl.pallas_call(
        _policy_kernel,
        out_shape=jax.ShapeDtypeStruct((pb, a_pad), jnp.bfloat16),
        grid_spec=pltpu.PrefetchScalarGridSpec(
            num_scalar_prefetch=0,
            grid=(pb // tile_b,),
            in_specs=[
                pl.BlockSpec((tile_b, s_pad), lambda i: (i, 0)),   # batch tile
                const(w1.shape), const(b1.shape),
                const(w2.shape), const(b2.shape),
                const(w3.shape), const(b3.shape),
            ],
            out_specs=pl.BlockSpec((tile_b, a_pad), lambda i: (i, 0)),
        ),
        compiler_params=pltpu.CompilerParams(
            dimension_semantics=("parallel",)),
    )(xk, w1, b1, w2, b2, w3, b3)
    # TODO(synk): pack 16 batch rows x 8 probs into one 128-lane row in-kernel
    # (out_shape (pb//16, 128)) for a further 8x cut in writeback bytes.
    return out[:batch, :a_size].astype(jnp.float32)


def init_linear(key, fan_in, fan_out):
    """torch.nn.Linear-style init: U[-1/sqrt(fan_in), 1/sqrt(fan_in)]."""
    kw, kb = jax.random.split(key)
    bound = 1.0 / jnp.sqrt(jnp.float32(fan_in))
    w = jax.random.uniform(kw, (fan_in, fan_out), jnp.float32, -bound, bound)
    b = jax.random.uniform(kb, (fan_out,), jnp.float32, -bound, bound)
    return w, b


def pack_params(params, a_pad=128, mask_value=-1e30):
    """Pad + pre-cast parameters for the kernel.

    Weights become bf16 [in_pad, out_pad] (zero-padded); biases stay f32 rows
    [1, out_pad].  The last layer's output dim is padded to `a_pad` lanes for a
    lane-dense store, and its padded bias lanes are set to a large negative so
    they drop out of the softmax with no in-kernel masking.
    """
    packed = []
    prev_out = None
    n = len(params)
    for i, (w, b) in enumerate(params):
        fan_in, fan_out = w.shape
        in_pad = _round_up(fan_in, 16) if prev_out is None else prev_out
        out_pad = a_pad if i == n - 1 else _round_up(fan_out, 16)
        wp = jnp.zeros((in_pad, out_pad), jnp.float32)
        wp = wp.at[:fan_in, :fan_out].set(w).astype(jnp.bfloat16)
        bp = jnp.zeros((1, out_pad), jnp.float32).at[0, :fan_out].set(b)
        if i == n - 1 and out_pad > fan_out:
            bp = bp.at[0, fan_out:].set(mask_value)   # softmax mask baked in
        packed += [wp, bp]
        prev_out = out_pad
    return packed


def reference_forward_f32(x, params):
    """Original Policy semantics in pure f32."""
    h = x
    n = len(params)
    for i, (w, b) in enumerate(params):
        h = h @ w + b[None, :]
        if i < n - 1:
            h = jnp.maximum(h, 0.0)
    return jax.nn.softmax(h, axis=1)


def reference_forward_bf16(x, params):
    """Same dtype recipe as the kernel: bf16 MXU operands, f32 accumulate."""
    h = x
    n = len(params)
    for i, (w, b) in enumerate(params):
        h = jnp.dot(h.astype(jnp.bfloat16), w.astype(jnp.bfloat16),
                    preferred_element_type=jnp.float32) + b[None, :]
        if i < n - 1:
            h = jnp.maximum(h, 0.0)
    return jax.nn.softmax(h, axis=1)


if __name__ == "__main__":
    # Sanity-check the adaptive tiling logic (pure Python, no TPU needed).
    assert _choose_tile_b(4) == 16 and _choose_tile_b(256) == 256
    _big = 10000
    _t = _choose_tile_b(_big)
    _steps = _round_up(_big, _t) // _t
    assert _steps >= 2 and _steps % 2 == 0          # v7x megacore sharding

    # Policy(s_size=16, a_size=8, h_sizes=[32, 32])
    s_size, a_size = 16, 8
    h_sizes = [32, 32]

    key = jax.random.PRNGKey(0)
    k1, k2, k3, kx = jax.random.split(key, 4)
    params = [
        init_linear(k1, s_size, h_sizes[0]),
        init_linear(k2, h_sizes[0], h_sizes[1]),
        init_linear(k3, h_sizes[1], a_size),
    ]
    w1, b1, w2, b2, w3, b3 = pack_params(params, a_pad=128)

    # batch=4: tiny single-tile path (original per-state use case);
    # batch=256: one large adaptive tile;
    # batch=512 with tile_b=128: multi-step grid on the "parallel" batch axis.
    for batch, tile_b in ((4, None), (256, None), (512, 128)):
        kx, sub = jax.random.split(kx)
        x = jax.random.normal(sub, (batch, s_size), jnp.float32)

        out = policy_forward(x, w1, b1, w2, b2, w3, b3,
                             a_size=a_size, tile_b=tile_b)
        out = jax.block_until_ready(out)

        ref16 = reference_forward_bf16(x, params)
        ref32 = reference_forward_f32(x, params)

        assert out.shape == (batch, a_size)
        assert bool(jnp.all(jnp.abs(jnp.sum(out, axis=1) - 1.0) < 1e-2))
        assert bool(jnp.allclose(out, ref16, atol=1e-2)), \
            float(jnp.max(jnp.abs(out - ref16)))
        assert bool(jnp.allclose(out, ref32, atol=5e-2)), \
            float(jnp.max(jnp.abs(out - ref32)))

    # TODO(synk): Policy.act() (Categorical sampling / log_prob) is host-side
    # glue in the original module; it could be fused here later with pltpu.prng_*.
    print("KERNEL_OK")
</pallas_src>

<mosaic_0001>
module attributes {stable_mosaic.version = 11 : i64} {
  func.func @_policy_kernel(%arg0: i32, %arg1: memref<16x16xbf16, #tpu.memory_space<vmem>>, %arg2: memref<16x32xbf16, #tpu.memory_space<vmem>>, %arg3: memref<1x32xf32, #tpu.memory_space<vmem>>, %arg4: memref<32x32xbf16, #tpu.memory_space<vmem>>, %arg5: memref<1x32xf32, #tpu.memory_space<vmem>>, %arg6: memref<32x128xbf16, #tpu.memory_space<vmem>>, %arg7: memref<1x128xf32, #tpu.memory_space<vmem>>, %arg8: memref<16x128xbf16, #tpu.memory_space<vmem>>) attributes {dimension_semantics = [#tpu.dimension_semantics<parallel>], iteration_bounds = array<i64: 1>, scalar_prefetch = 0 : i64, scratch_operands = 0 : i64, tpu.core_type = #tpu.core_type<tc>, window_params = [{transform_indices = @transform_0, window_bounds = array<i64: 16, 16>}, {pipeline_mode = #tpu.pipeline_mode<synchronous>, transform_indices = @transform_1, window_bounds = array<i64: 16, 32>}, {pipeline_mode = #tpu.pipeline_mode<synchronous>, transform_indices = @transform_2, window_bounds = array<i64: 1, 32>}, {pipeline_mode = #tpu.pipeline_mode<synchronous>, transform_indices = @transform_3, window_bounds = array<i64: 32, 32>}, {pipeline_mode = #tpu.pipeline_mode<synchronous>, transform_indices = @transform_4, window_bounds = array<i64: 1, 32>}, {pipeline_mode = #tpu.pipeline_mode<synchronous>, transform_indices = @transform_5, window_bounds = array<i64: 32, 128>}, {pipeline_mode = #tpu.pipeline_mode<synchronous>, transform_indices = @transform_6, window_bounds = array<i64: 1, 128>}, {transform_indices = @transform_7, window_bounds = array<i64: 16, 128>}]} {
    %c0 = arith.constant 0 : index
    %c0_0 = arith.constant 0 : index
    %0 = vector.load %arg1[%c0, %c0_0] : memref<16x16xbf16, #tpu.memory_space<vmem>>, vector<16x16xbf16>
    %c0_1 = arith.constant 0 : index
    %c0_2 = arith.constant 0 : index
    %1 = vector.load %arg2[%c0_1, %c0_2] : memref<16x32xbf16, #tpu.memory_space<vmem>>, vector<16x32xbf16>
    %cst = arith.constant dense<0.000000e+00> : vector<16x32xf32>
    %2 = tpu.matmul %0, %1, %cst {dimension_numbers = #tpu.dot_dimension_numbers<[1], [0], [0], [1], [0, 0, 1, 1], [], []>} : vector<16x16xbf16>, vector<16x32xbf16>, vector<16x32xf32> -> vector<16x32xf32>
    %c0_3 = arith.constant 0 : index
    %c0_4 = arith.constant 0 : index
    %3 = vector.load %arg3[%c0_3, %c0_4] : memref<1x32xf32, #tpu.memory_space<vmem>>, vector<1x32xf32>
    %4 = vector.broadcast %3 : vector<1x32xf32> to vector<16x32xf32>
    %5 = arith.addf %2, %4 : vector<16x32xf32>
    %cst_5 = arith.constant 0.000000e+00 : f32
    %6 = vector.broadcast %cst_5 : f32 to vector<16x32xf32>
    %7 = arith.maximumf %5, %6 : vector<16x32xf32>
    %8 = arith.truncf %7 : vector<16x32xf32> to vector<16x32xbf16>
    %c0_6 = arith.constant 0 : index
    %c0_7 = arith.constant 0 : index
    %9 = vector.load %arg4[%c0_6, %c0_7] : memref<32x32xbf16, #tpu.memory_space<vmem>>, vector<32x32xbf16>
    %cst_8 = arith.constant dense<0.000000e+00> : vector<16x32xf32>
    %10 = tpu.matmul %8, %9, %cst_8 {dimension_numbers = #tpu.dot_dimension_numbers<[1], [0], [0], [1], [0, 0, 1, 1], [], []>} : vector<16x32xbf16>, vector<32x32xbf16>, vector<16x32xf32> -> vector<16x32xf32>
    %c0_9 = arith.constant 0 : index
    %c0_10 = arith.constant 0 : index
    %11 = vector.load %arg5[%c0_9, %c0_10] : memref<1x32xf32, #tpu.memory_space<vmem>>, vector<1x32xf32>
    %12 = vector.broadcast %11 : vector<1x32xf32> to vector<16x32xf32>
    %13 = arith.addf %10, %12 : vector<16x32xf32>
    %cst_11 = arith.constant 0.000000e+00 : f32
    %14 = vector.broadcast %cst_11 : f32 to vector<16x32xf32>
    %15 = arith.maximumf %13, %14 : vector<16x32xf32>
    %16 = arith.truncf %15 : vector<16x32xf32> to vector<16x32xbf16>
    %c0_12 = arith.constant 0 : index
    %c0_13 = arith.constant 0 : index
    %17 = vector.load %arg6[%c0_12, %c0_13] : memref<32x128xbf16, #tpu.memory_space<vmem>>, vector<32x128xbf16>
    %cst_14 = arith.constant dense<0.000000e+00> : vector<16x128xf32>
    %18 = tpu.matmul %16, %17, %cst_14 {dimension_numbers = #tpu.dot_dimension_numbers<[1], [0], [0], [1], [0, 0, 1, 1], [], []>} : vector<16x32xbf16>, vector<32x128xbf16>, vector<16x128xf32> -> vector<16x128xf32>
    %c0_15 = arith.constant 0 : index
    %c0_16 = arith.constant 0 : index
    %19 = vector.load %arg7[%c0_15, %c0_16] : memref<1x128xf32, #tpu.memory_space<vmem>>, vector<1x128xf32>
    %20 = vector.broadcast %19 : vector<1x128xf32> to vector<16x128xf32>
    %21 = arith.addf %18, %20 : vector<16x128xf32>
    %cst_17 = arith.constant dense<0xFF800000> : vector<16xf32>
    %22 = vector.multi_reduction <maximumf>, %21, %cst_17 [1] : vector<16x128xf32> to vector<16xf32>
    %23 = vector.shape_cast %22 : vector<16xf32> to vector<16x1xf32>
    %24 = vector.broadcast %23 : vector<16x1xf32> to vector<16x128xf32>
    %25 = arith.subf %21, %24 : vector<16x128xf32>
    %26 = math.exp %25 : vector<16x128xf32>
    %cst_18 = arith.constant dense<0.000000e+00> : vector<16xf32>
    %27 = vector.multi_reduction <add>, %26, %cst_18 [1] : vector<16x128xf32> to vector<16xf32>
    %28 = vector.shape_cast %27 : vector<16xf32> to vector<16x1xf32>
    %29 = tpu.reciprocal %28 : vector<16x1xf32> -> vector<16x1xf32>
    %30 = vector.broadcast %29 : vector<16x1xf32> to vector<16x128xf32>
    %31 = arith.mulf %26, %30 : vector<16x128xf32>
    %32 = arith.truncf %31 : vector<16x128xf32> to vector<16x128xbf16>
    %c0_19 = arith.constant 0 : index
    %c0_20 = arith.constant 0 : index
    %33 = vector.load %arg8[%c0_19, %c0_20] : memref<16x128xbf16, #tpu.memory_space<vmem>>, vector<16x128xbf16>
    tpu.vector_store %arg8[%c0_19, %c0_20], %32 {strides = array<i32>} : memref<16x128xbf16, #tpu.memory_space<vmem>>, vector<16x128xbf16>,
    return
  }
  func.func @transform_0(%arg0: i32) -> (i32, i32) {
    %c0_i32 = arith.constant 0 : i32
    %c0_i32_0 = arith.constant 0 : i32
    return %arg0, %c0_i32 : i32, i32
  }
  func.func @transform_1(%arg0: i32) -> (i32, i32) {
    %c0_i32 = arith.constant 0 : i32
    %c0_i32_0 = arith.constant 0 : i32
    %c0_i32_1 = arith.constant 0 : i32
    return %c0_i32, %c0_i32_0 : i32, i32
  }
  func.func @transform_2(%arg0: i32) -> (i32, i32) {
    %c0_i32 = arith.constant 0 : i32
    %c0_i32_0 = arith.constant 0 : i32
    %c0_i32_1 = arith.constant 0 : i32
    return %c0_i32, %c0_i32_0 : i32, i32
  }
  func.func @transform_3(%arg0: i32) -> (i32, i32) {
    %c0_i32 = arith.constant 0 : i32
    %c0_i32_0 = arith.constant 0 : i32
    %c0_i32_1 = arith.constant 0 : i32
    return %c0_i32, %c0_i32_0 : i32, i32
  }
  func.func @transform_4(%arg0: i32) -> (i32, i32) {
    %c0_i32 = arith.constant 0 : i32
    %c0_i32_0 = arith.constant 0 : i32
    %c0_i32_1 = arith.constant 0 : i32
    return %c0_i32, %c0_i32_0 : i32, i32
  }
  func.func @transform_5(%arg0: i32) -> (i32, i32) {
    %c0_i32 = arith.constant 0 : i32
    %c0_i32_0 = arith.constant 0 : i32
    %c0_i32_1 = arith.constant 0 : i32
    return %c0_i32, %c0_i32_0 : i32, i32
  }
  func.func @transform_6(%arg0: i32) -> (i32, i32) {
    %c0_i32 = arith.constant 0 : i32
    %c0_i32_0 = arith.constant 0 : i32
    %c0_i32_1 = arith.constant 0 : i32
    return %c0_i32, %c0_i32_0 : i32, i32
  }
  func.func @transform_7(%arg0: i32) -> (i32, i32) {
    %c0_i32 = arith.constant 0 : i32
    %c0_i32_0 = arith.constant 0 : i32
    return %arg0, %c0_i32 : i32, i32
  }
}

</mosaic_0001>

<llo_original>
// kernel: policy_forward.1
$region0: #{policy_forward.1}
  #allocation0 [shape = 'u32[]', space=smem, size = 0x4, offset = 0x4, fixed_abs, tag = 'smem constant byte address 0x4 - core index']
  #allocation1 [shape = 'u32[144,128]{1,0:T(1,128)}', space=vmem, size = 0x12000, scoped, tag = 'internal scratch']
  %s0 = inlined_call_operand.vmem [shape: bf16[16,16], index: 0, kind: input, shape index: {}]
  %s1 = inlined_call_operand.hbm [shape: bf16[16,32], index: 1, kind: input, shape index: {}]
  %s2 = inlined_call_operand.vmem [shape: f32[1,32], index: 2, kind: input, shape index: {}]
  %s3 = inlined_call_operand.vmem [shape: bf16[32,32], index: 3, kind: input, shape index: {}]
  %s4 = inlined_call_operand.vmem [shape: f32[1,32], index: 4, kind: input, shape index: {}]
  %s5 = inlined_call_operand.hbm [shape: bf16[32,128], index: 5, kind: input, shape index: {}]
  %s6 = inlined_call_operand.vmem [shape: f32[1,128], index: 6, kind: input, shape index: {}]
  %s7 = inlined_call_operand.vmem [shape: bf16[16,128], index: 7, kind: output, shape index: {}]
  %s8 = sld [smem:[#allocation0]]
  $region46: #{policy_forward.1} parent=0
    _
  %s10 = ssub.s32 1, %s8
  %s11 = scalar_select 0, %s10, %s8
  $region1: #{policy_forward.1} parent=0
    #allocation2 [shape = 'u8[4096]{0}', space=vmem, size = 0x1000, scoped, tag = 'input window, operand 1, single buffered']
    #allocation3 [shape = 's32[1]{0}', space=sflag, size = 0x4, scoped, tag = 'scoped memory for policy_forward.1']
    #allocation4 [shape = 'u8[8192]{0}', space=vmem, size = 0x2000, scoped, tag = 'input window, operand 5, single buffered']
    #allocation5 [shape = 's32[1]{0}', space=sflag, size = 0x4, scoped, tag = 'scoped memory for policy_forward.1']
    %12 = vsyncpa [#allocation3], 0
    %13 = vsyncpa [#allocation5], 0
    // Predicated region
    $region2: #{policy_forward.1} parent=1 // pred_check
      _
    $region3: #{policy_forward.1} parent=1 // pred_check_branch
      %15 = sbr.rel (0) target = $region5
    $region4: #{policy_forward.1} parent=1 // pred_region
      _
    $region5: #{policy_forward.1} parent=1 // pred_fallthru
      _
    // Predicated region
    $region6: #{policy_forward.1} parent=1 // pred_check
      _
    $region7: #{policy_forward.1} parent=1 // pred_check_branch
      %17 = sbr.rel (0) target = $region9
    $region8: #{policy_forward.1} parent=1 // pred_region
      %s19 = ssub.s32 128, 128
      %20 = vsyncadd [#allocation3], %s19
      %s21 = sshll.u32 [#allocation2], 4
      %s22 = int_to_ptr.vmem [resolvable:$true] %s21
      %27 = dma.hbm_to_vmem [thread:$0]  %s1, 128, %s22, [#allocation3], 64, 64, 4
    $region9: #{policy_forward.1} parent=1 // pred_fallthru
      _
    // Predicated region
    $region10: #{policy_forward.1} parent=1 // pred_check
      _
    $region11: #{policy_forward.1} parent=1 // pred_check_branch
      %29 = sbr.rel (0) target = $region13
    $region12: #{policy_forward.1} parent=1 // pred_region
      _
    $region13: #{policy_forward.1} parent=1 // pred_fallthru
      _
    // Predicated region
    $region14: #{policy_forward.1} parent=1 // pred_check
      _
    $region15: #{policy_forward.1} parent=1 // pred_check_branch
      %31 = sbr.rel (0) target = $region17
    $region16: #{policy_forward.1} parent=1 // pred_region
      _
    $region17: #{policy_forward.1} parent=1 // pred_fallthru
      _
    // Predicated region
    $region18: #{policy_forward.1} parent=1 // pred_check
      _
    $region19: #{policy_forward.1} parent=1 // pred_check_branch
      %33 = sbr.rel (0) target = $region21
    $region20: #{policy_forward.1} parent=1 // pred_region
      _
    $region21: #{policy_forward.1} parent=1 // pred_fallthru
      _
    // Predicated region
    $region22: #{policy_forward.1} parent=1 // pred_check
      _
    $region23: #{policy_forward.1} parent=1 // pred_check_branch
      %35 = sbr.rel (0) target = $region25
    $region24: #{policy_forward.1} parent=1 // pred_region
      %s37 = ssub.s32 256, 256
      %38 = vsyncadd [#allocation5], %s37
      %s39 = sshll.u32 [#allocation4], 4
      %s40 = int_to_ptr.vmem [resolvable:$true] %s39
      %45 = dma.hbm_to_vmem [thread:$0]  %s5, 256, %s40, [#allocation5], 64, 64, 4
    $region25: #{policy_forward.1} parent=1 // pred_fallthru
      _
    // Predicated region
    $region26: #{policy_forward.1} parent=1 // pred_check
      _
    $region27: #{policy_forward.1} parent=1 // pred_check_branch
      %47 = sbr.rel (0) target = $region29
    $region28: #{policy_forward.1} parent=1 // pred_region
      _
    $region29: #{policy_forward.1} parent=1 // pred_fallthru
      _
    // Predicated region
    $region30: #{policy_forward.1} parent=1 // pred_check
      _
    $region31: #{policy_forward.1} parent=1 // pred_check_branch
      %49 = sbr.rel (0) target = $region33
    $region32: #{policy_forward.1} parent=1 // pred_region
      %50 = dma.done [#allocation3], 128
    $region33: #{policy_forward.1} parent=1 // pred_fallthru
      _
    // Predicated region
    $region34: #{policy_forward.1} parent=1 // pred_check
      _
    $region35: #{policy_forward.1} parent=1 // pred_check_branch
      %52 = sbr.rel (0) target = $region37
    $region36: #{policy_forward.1} parent=1 // pred_region
      %53 = dma.done [#allocation5], 256
    $region37: #{policy_forward.1} parent=1 // pred_fallthru
      _
    %v55 = vld [vmem:[%s0] sm:$0xf]
    %v56 = vld [vmem:[%s0 + $0x4] sm:$0xf]
    %v57 = vld [vmem:[#allocation2] sm:$0xf]
    %v58 = vld [vmem:[#allocation2 + $0x4] sm:$0xf]
    %v59 = vld [vmem:[%s2] sm:$0x1]
    %v61 = vlaneseq
    %v62 = vshrl.u32 %v61, 7
    %v63 = vsub.s32 0, %v62
    %v64 = vrot.slane %v59, %v63
    %v68 = vunpack.c.l.b16 %v55
    %v69 = vunpack.c.l.b16 %v56
    %v70 = vpack.c.b16 %v69, %v68
    %v73 = vunpack.c.l.b16 %v57
    %v74 = vunpack.c.l.b16 %v58
    %v75 = vpack.c.b16 %v74, %v73
    %vm77 = vcmask 130048
    %v79 = vsel %vm77, %v70, 0
    %81 = vmatprep.subr.bf16.mxu0 0
    %82 = vmatpush1.bf16.msra.mxu0 0
    %83 = vmatprep.subr.bf16.mxu0 0
    %84 = vmatpush1.bf16.msra.mxu0 0
    %85 = vmatprep.subr.bf16.mxu0 0
    %86 = vmatpush1.bf16.msra.mxu0 0
    %87 = vmatprep.subr.bf16.mxu0 0
    %88 = vmatpush1.bf16.msra.mxu0 0
    %89 = vmatprep.subr.bf16.mxu0 0
    %90 = vmatpush1.bf16.msra.mxu0 0
    %91 = vmatprep.subr.bf16.mxu0 0
    %92 = vmatpush1.bf16.msra.mxu0 0
    %93 = vmatprep.subr.bf16.mxu0 0
    %94 = vmatpush1.bf16.msra.mxu0 0
    %95 = vmatprep.subr.bf16.mxu0 0
    %96 = vmatpush1.bf16.msra.mxu0 %v75
    %97 = vmatprep.subr.bf16.mxu0 0
    %98 = vmatpush2.bf16.msra.mxu0 0
    %99 = vmatprep.subr.bf16.mxu0 0
    %100 = vmatpush2.bf16.msra.mxu0 0
    %101 = vmatprep.subr.bf16.mxu0 0
    %102 = vmatpush2.bf16.msra.mxu0 0
    %103 = vmatprep.subr.bf16.mxu0 0
    %104 = vmatpush2.bf16.msra.mxu0 0
    %105 = vmatprep.subr.bf16.mxu0 0
    %106 = vmatpush2.bf16.msra.mxu0 0
    %107 = vmatprep.subr.bf16.mxu0 0
    %108 = vmatpush2.bf16.msra.mxu0 0
    %109 = vmatprep.subr.bf16.mxu0 0
    %110 = vmatpush2.bf16.msra.mxu0 0
    %111 = vmatprep.subr.bf16.mxu0 0
    %112 = vmatpush2.bf16.msra.mxu0 0
    %113 = vmatprep.mubr.bf16.mxu0 0
    %114 = vmatmul.mubr.bf16.gmra.mxu0 %v79
    %v115 = vpop.f32.mrf.mxu0
    %v116 = vadd.f32 %v64, %v115
    %v117 = vpop.f32.mrf.mxu0
    %v118 = vpop.f32.mrf.mxu0
    %v119 = vadd.f32 %v64, %v118
    %v120 = vpop.f32.mrf.mxu0
    %121 = vdwg.mxu0
    %v122 = vmax.f32 %v116, 0.0
    %v123 = vmax.f32 %v119, 0.0
    %v124 = vpack.c.bf16 %v123, %v122
    %v125 = vld [vmem:[%s3] sm:$0xf]
    %v126 = vld [vmem:[%s3 + $0x4] sm:$0xf]
    %v127 = vld [vmem:[%s3 + $0x8] sm:$0xf]
    %v128 = vld [vmem:[%s3 + $0xc] sm:$0xf]
    %v129 = vld [vmem:[%s4] sm:$0x1]
    %v131 = vlaneseq
    %v132 = vshrl.u32 %v131, 7
    %v133 = vsub.s32 0, %v132
    %v134 = vrot.slane %v129, %v133
    %v140 = vunpack.c.l.b16 %v125
    %v141 = vunpack.c.l.b16 %v126
    %v142 = vunpack.c.l.b16 %v127
    %v143 = vunpack.c.l.b16 %v128
    %v144 = vpack.c.b16 %v141, %v140
    %v145 = vpack.c.b16 %v143, %v142
    %vm148 = vcmask 261120
    %v150 = vsel %vm148, %v124, 0
    %152 = vmatprep.subr.bf16.mxu0 0
    %153 = vmatpush1.bf16.msra.mxu0 0
    %154 = vmatprep.subr.bf16.mxu0 0
    %155 = vmatpush1.bf16.msra.mxu0 0
    %156 = vmatprep.subr.bf16.mxu0 0
    %157 = vmatpush1.bf16.msra.mxu0 0
    %158 = vmatprep.subr.bf16.mxu0 0
    %159 = vmatpush1.bf16.msra.mxu0 0
    %160 = vmatprep.subr.bf16.mxu0 0
    %161 = vmatpush1.bf16.msra.mxu0 0
    %162 = vmatprep.subr.bf16.mxu0 0
    %163 = vmatpush1.bf16.msra.mxu0 0
    %164 = vmatprep.subr.bf16.mxu0 0
    %165 = vmatpush1.bf16.msra.mxu0 %v145
    %166 = vmatprep.subr.bf16.mxu0 0
    %167 = vmatpush1.bf16.msra.mxu0 %v144
    %168 = vmatprep.subr.bf16.mxu0 0
    %169 = vmatpush2.bf16.msra.mxu0 0
    %170 = vmatprep.subr.bf16.mxu0 0
    %171 = vmatpush2.bf16.msra.mxu0 0
    %172 = vmatprep.subr.bf16.mxu0 0
    %173 = vmatpush2.bf16.msra.mxu0 0
    %174 = vmatprep.subr.bf16.mxu0 0
    %175 = vmatpush2.bf16.msra.mxu0 0
    %176 = vmatprep.subr.bf16.mxu0 0
    %177 = vmatpush2.bf16.msra.mxu0 0
    %178 = vmatprep.subr.bf16.mxu0 0
    %179 = vmatpush2.bf16.msra.mxu0 0
    %180 = vmatprep.subr.bf16.mxu0 0
    %181 = vmatpush2.bf16.msra.mxu0 0
    %182 = vmatprep.subr.bf16.mxu0 0
    %183 = vmatpush2.bf16.msra.mxu0 0
    %184 = vmatprep.mubr.bf16.mxu0 0
    %185 = vmatmul.mubr.bf16.gmra.mxu0 %v150
    %v186 = vpop.f32.mrf.mxu0
    %v187 = vadd.f32 %v134, %v186
    %v188 = vpop.f32.mrf.mxu0
    %v189 = vpop.f32.mrf.mxu0
    %v190 = vadd.f32 %v134, %v189
    %v191 = vpop.f32.mrf.mxu0
    %192 = vdwg.mxu0
    %v193 = vmax.f32 %v187, 0.0
    %v194 = vmax.f32 %v190, 0.0
    %v195 = vpack.c.bf16 %v194, %v193
    %v196 = vld [vmem:[#allocation4] sm:$0xf]
    %v197 = vld [vmem:[#allocation4 + $0x4] sm:$0xf]
    %v198 = vld [vmem:[#allocation4 + $0x8] sm:$0xf]
    %v199 = vld [vmem:[#allocation4 + $0xc] sm:$0xf]
    %v200 = vld [vmem:[%s6] sm:$0x1]
    %v202 = vlaneseq
    %v203 = vshrl.u32 %v202, 7
    %v204 = vsub.s32 0, %v203
    %v205 = vrot.slane %v200, %v204
    %v211 = vunpack.c.l.b16 %v196
    %v212 = vunpack.c.l.b16 %v197
    %v213 = vunpack.c.l.b16 %v198
    %v214 = vunpack.c.l.b16 %v199
    %v215 = vpack.c.b16 %v212, %v211
    %v216 = vpack.c.b16 %v214, %v213
    %v220 = vsel %vm148, %v195, 0
    %222 = vmatprep.subr.bf16.mxu0 0
    %223 = vmatpush1.bf16.msra.mxu0 0
    %224 = vmatprep.subr.bf16.mxu0 0
    %225 = vmatpush1.bf16.msra.mxu0 0
    %226 = vmatprep.subr.bf16.mxu0 0
    %227 = vmatpush1.bf16.msra.mxu0 0
    %228 = vmatprep.subr.bf16.mxu0 0
    %229 = vmatpush1.bf16.msra.mxu0 0
    %230 = vmatprep.subr.bf16.mxu0 0
    %231 = vmatpush1.bf16.msra.mxu0 0
    %232 = vmatprep.subr.bf16.mxu0 0
    %233 = vmatpush1.bf16.msra.mxu0 0
    %234 = vmatprep.subr.bf16.mxu0 0
    %235 = vmatpush1.bf16.msra.mxu0 %v216
    %236 = vmatprep.subr.bf16.mxu0 0
    %237 = vmatpush1.bf16.msra.mxu0 %v215
    %238 = vmatprep.subr.bf16.mxu0 0
    %239 = vmatpush2.bf16.msra.mxu0 0
    %240 = vmatprep.subr.bf16.mxu0 0
    %241 = vmatpush2.bf16.msra.mxu0 0
    %242 = vmatprep.subr.bf16.mxu0 0
    %243 = vmatpush2.bf16.msra.mxu0 0
    %244 = vmatprep.subr.bf16.mxu0 0
    %245 = vmatpush2.bf16.msra.mxu0 0
    %246 = vmatprep.subr.bf16.mxu0 0
    %247 = vmatpush2.bf16.msra.mxu0 0
    %248 = vmatprep.subr.bf16.mxu0 0
    %249 = vmatpush2.bf16.msra.mxu0 0
    %250 = vmatprep.subr.bf16.mxu0 0
    %251 = vmatpush2.bf16.msra.mxu0 0
    %252 = vmatprep.subr.bf16.mxu0 0
    %253 = vmatpush2.bf16.msra.mxu0 0
    %254 = vmatprep.mubr.bf16.mxu0 0
    %255 = vmatmul.mubr.bf16.gmra.mxu0 %v220
    %v256 = vpop.f32.mrf.mxu0
    %v257 = vadd.f32 %v205, %v256
    %v258 = vpop.f32.mrf.mxu0
    %v259 = vpop.f32.mrf.mxu0
    %v260 = vadd.f32 %v205, %v259
    %v261 = vpop.f32.mrf.mxu0
    %262 = vdwg.mxu0
    %263 = vmax.xlane.f32.xlu0 %v257
    %v264 = vpop.xlane.xlu0 %263
    %265 = vmax.xlane.f32.xlu0 %v260
    %v266 = vpop.xlane.xlu0 %265
    %v267 = vsub.f32 %v257, %v264
    %v268 = vsub.f32 %v260, %v266
    %v269 = vmul.f32 %v267, 1.442695
    %v270 = vpow.pop %v269
    %v271 = vmul.f32 %v268, 1.442695
    %v272 = vpow.pop %v271
    %273 = vadd.xlane.f32.xlu0 %v270
    %v274 = vpop.xlane.xlu0 %273
    %275 = vadd.xlane.f32.xlu0 %v272
    %v276 = vpop.xlane.xlu0 %275
    %v277 = vrcp.pop %v274
    %v278 = vrcp.pop %v276
    %v279 = vmul.f32 %v270, %v277
    %v280 = vmul.f32 %v272, %v278
    %v281 = vpack.c.bf16 %v280, %v279
    %v283 = vunpack.c.l.b16 %v281
    %v284 = vunpack.c.h.b16 %v281
    %v285 = vpack.c.b16 %v283, %v283
    %v286 = vpack.c.b16 %v284, %v284
    %289 = vst [vmem:[%s7] sm:$0xf] %v285
    %290 = vst [vmem:[%s7 + $0x4] sm:$0xf] %v286
    // Predicated region
    $region38: #{policy_forward.1} parent=1 // pred_check
      _
    $region39: #{policy_forward.1} parent=1 // pred_check_branch
      %292 = sbr.rel (0) target = $region41
    $region40: #{policy_forward.1} parent=1 // pred_region
      _
    $region41: #{policy_forward.1} parent=1 // pred_fallthru
      _
    // Predicated region
    $region42: #{policy_forward.1} parent=1 // pred_check
      _
    $region43: #{policy_forward.1} parent=1 // pred_check_branch
      %294 = sbr.rel (0) target = $region45
    $region44: #{policy_forward.1} parent=1 // pred_region
      _
    $region45: #{policy_forward.1} parent=1 // pred_fallthru
      _
    %295 = vsyncpa [#allocation3], 1
    %296 = vsyncpa [#allocation5], 1

</llo_original>
